<compile_context>
chip_gen: v5e
topology: v5e:2x2
jax: 0.10.0
libtpu: 0.0.40
codegen_flags: <defaults>
</compile_context>

<pallas_src>
import numpy as np
import jax
import jax.numpy as jnp
from jax.experimental import pallas as pl
from jax.experimental.pallas import tpu as pltpu


def _numpy_params():
    # conv1: fill(-1) then += eye(2) broadcast over (out=2, in=1, 2, 2)
    w1 = np.full((2, 1, 2, 2), -1.0, np.float32) + np.eye(2, dtype=np.float32)
    b1 = np.full((2,), -2.0, np.float32)
    # conv2: fill(0) then += eye(3) broadcast over (out=1, in=2, 3, 3)
    w2 = np.zeros((1, 2, 3, 3), np.float32) + np.eye(3, dtype=np.float32)
    b2 = np.zeros((1,), np.float32)
    return w1, b1, w2, b2


def _vmem_budget_and_cap():
    """Per-generation tuning: (vmem_limit_bytes, max batch lanes per grid step)."""
    try:
        vmem_bytes = int(pltpu.get_tpu_info().vmem_capacity_bytes)
    except Exception:
        vmem_bytes = 64 * 1024 * 1024            # conservative: assume v7x (64 MiB/TC)
    if vmem_bytes >= 96 * 1024 * 1024:           # v5e / v6e: 128 MiB physical VMEM
        return 96 * 1024 * 1024, 4096
    return 48 * 1024 * 1024, 2048                # v7x: 64 MiB physical VMEM


_VMEM_LIMIT, _BBLK_CAP = _vmem_budget_and_cap()


def _pick_batch_block(n_pad, cap):
    """n_pad is a multiple of 128.  Pick the largest 128*d that divides n_pad,
    is <= cap, and (when possible) leaves >= 2 grid steps (v7x has 2 TCs)."""
    units = n_pad // 128
    cap_units = max(1, cap // 128)
    divs = [d for d in range(1, units + 1) if units % d == 0 and d <= cap_units]
    multi = [d for d in divs if units // d >= 2]
    d = max(multi) if multi else max(divs)
    return 128 * d


def _make_fused_kernel(w1, b1, w2, b2, h, w):
    """Kernel with the (compile-time constant) weights baked in.

    Zero taps are skipped; +-1 taps become adds/subs (no multiplies at all).
    """
    cout1, cin1, k1, _ = w1.shape
    cout2, cin2, k2, _ = w2.shape
    assert cin1 == 1 and cout2 == 1 and cin2 == cout1
    h1, w1o = h - k1 + 1, w - k1 + 1          # conv1 output spatial dims
    h2, w2o = h1 - k2 + 1, w1o - k2 + 1       # conv2 output spatial dims

    def add_tap(acc, sl, wv):
        if wv == 1.0:
            return acc + sl
        if wv == -1.0:
            return acc - sl
        return acc + sl * wv                  # not hit for this model's weights

    def kernel(x_ref, o_ref):
        # x_ref: VMEM (1, h, w, B_blk)   -- batch on the lane axis
        # o_ref: VMEM (1, h2, w2o, B_blk)
        b_blk = x_ref.shape[-1]
        x = x_ref[0]                          # (h, w, B_blk), single whole-tile load

        acc2 = jnp.full((h2, w2o, b_blk), float(b2[0]), jnp.float32)
        # Consume each conv1 channel immediately -> only one intermediate live.
        for ci in range(cout1):               # conv1 out-channel == conv2 in-channel
            y = jnp.full((h1, w1o, b_blk), float(b1[ci]), jnp.float32)
            for kh in range(k1):
                for kw in range(k1):
                    wv = float(w1[ci, 0, kh, kw])
                    if wv != 0.0:
                        y = add_tap(y, x[kh:kh + h1, kw:kw + w1o, :], wv)
            for kh in range(k2):
                for kw in range(k2):
                    wv = float(w2[0, ci, kh, kw])
                    if wv != 0.0:
                        acc2 = add_tap(acc2, y[kh:kh + h2, kw:kw + w2o, :], wv)
        o_ref[0] = acc2

    return kernel, (cout2, h2, w2o)


def _two_conv_forward_impl(x):
    """x: (N, 1, H, W) float32 NCHW -> (N, 1, H-3, W-3) float32."""
    n, cin, h, w = x.shape
    w1, b1, w2, b2 = _numpy_params()
    kernel, (cout2, h2, w2o) = _make_fused_kernel(w1, b1, w2, b2, h, w)

    x = x.astype(jnp.float32)

    # Pad the batch up to a multiple of 128 so it maps lane-dense (no masked
    # stores); the padded tail is discarded after the kernel.
    n_pad = -(-n // 128) * 128
    if n_pad != n:
        x = jnp.pad(x, ((0, n_pad - n), (0, 0), (0, 0), (0, 0)))

    b_blk = _pick_batch_block(n_pad, _BBLK_CAP)
    grid = (n_pad // b_blk,)

    # Lane-dense layout: (N, C, H, W) -> (C, H, W, N); batch maps to lanes.
    x_t = jnp.transpose(x, (1, 2, 3, 0))

    k1 = w1.shape[2]
    h1, w1o = h - k1 + 1, w - k1 + 1
    nz1 = int(np.count_nonzero(w1))
    nz2 = int(np.count_nonzero(w2))
    flops = 2 * n_pad * (nz1 * h1 * w1o + nz2 * h2 * w2o)
    bytes_accessed = 4 * n_pad * (cin * h * w + cout2 * h2 * w2o)

    out_t = pl.pallas_call(
        kernel,
        out_shape=jax.ShapeDtypeStruct((cout2, h2, w2o, n_pad), jnp.float32),
        grid=grid,
        in_specs=[
            pl.BlockSpec((cin, h, w, b_blk), lambda i: (0, 0, 0, i)),
        ],
        out_specs=pl.BlockSpec((cout2, h2, w2o, b_blk), lambda i: (0, 0, 0, i)),
        compiler_params=pltpu.CompilerParams(
            dimension_semantics=("parallel",),
            vmem_limit_bytes=_VMEM_LIMIT),
        cost_estimate=pl.CostEstimate(
            flops=flops, transcendentals=0, bytes_accessed=bytes_accessed),
    )(x_t)

    # Back to NCHW and drop batch padding.
    out = jnp.transpose(out_t, (3, 0, 1, 2))
    return out[:n]


two_conv_forward = jax.jit(_two_conv_forward_impl)


def _reference(x):
    # Plain-JAX reference for a correctness check.
    w1, b1, w2, b2 = _numpy_params()
    w1, b1, w2, b2 = map(jnp.asarray, (w1, b1, w2, b2))

    def conv(x, w, b):
        y = jax.lax.conv_general_dilated(
            x, w, window_strides=(1, 1), padding="VALID",
            dimension_numbers=("NCHW", "OIHW", "NCHW"))
        return y + b[None, :, None, None]

    return conv(conv(x.astype(jnp.float32), w1, b1), w2, b2)


if __name__ == "__main__":
    key = jax.random.PRNGKey(0)
    # TwoConvTestModel expects 1 input channel (Conv2d(1, 2, 2) first).
    x = jax.random.normal(key, (2, 1, 16, 16), dtype=jnp.float32)

    out = two_conv_forward(x)
    out = jax.block_until_ready(out)

    ref = _reference(x)
    assert out.shape == (2, 1, 13, 13), out.shape
    assert jnp.allclose(out, ref, atol=1e-4, rtol=1e-4), "mismatch vs reference"

    print("KERNEL_OK")
</pallas_src>

<mosaic_0001>
module attributes {stable_mosaic.version = 11 : i64} {
  func.func @kernel(%arg0: i32, %arg1: memref<1x16x16x128xf32, #tpu.memory_space<vmem>>, %arg2: memref<1x13x13x128xf32, #tpu.memory_space<vmem>>) attributes {dimension_semantics = [#tpu.dimension_semantics<parallel>], iteration_bounds = array<i64: 1>, scalar_prefetch = 0 : i64, scratch_operands = 0 : i64, tpu.core_type = #tpu.core_type<tc>, window_params = [{transform_indices = @transform_0, window_bounds = array<i64: 1, 16, 16, 128>}, {transform_indices = @transform_1, window_bounds = array<i64: 1, 13, 13, 128>}]} {
    %c0 = arith.constant 0 : index
    %c0_0 = arith.constant 0 : index
    %c0_1 = arith.constant 0 : index
    %c0_2 = arith.constant 0 : index
    %0 = vector.load %arg1[%c0, %c0_0, %c0_1, %c0_2] : memref<1x16x16x128xf32, #tpu.memory_space<vmem>>, vector<1x16x16x128xf32>
    %1 = vector.shape_cast %0 : vector<1x16x16x128xf32> to vector<16x16x128xf32>
    %cst = arith.constant 0.000000e+00 : f32
    %2 = vector.broadcast %cst : f32 to vector<13x13x128xf32>
    %cst_3 = arith.constant -2.000000e+00 : f32
    %3 = vector.broadcast %cst_3 : f32 to vector<15x15x128xf32>
    %4 = vector.extract_strided_slice %1 {offsets = [0, 1, 0], sizes = [15, 15, 128], strides = [1, 1, 1]} : vector<16x16x128xf32> to vector<15x15x128xf32>
    %5 = arith.subf %3, %4 : vector<15x15x128xf32>
    %6 = vector.extract_strided_slice %1 {offsets = [1, 0, 0], sizes = [15, 15, 128], strides = [1, 1, 1]} : vector<16x16x128xf32> to vector<15x15x128xf32>
    %7 = arith.subf %5, %6 : vector<15x15x128xf32>
    %8 = vector.extract_strided_slice %7 {offsets = [0, 0, 0], sizes = [13, 13, 128], strides = [1, 1, 1]} : vector<15x15x128xf32> to vector<13x13x128xf32>
    %9 = arith.addf %2, %8 : vector<13x13x128xf32>
    %10 = vector.extract_strided_slice %7 {offsets = [1, 1, 0], sizes = [13, 13, 128], strides = [1, 1, 1]} : vector<15x15x128xf32> to vector<13x13x128xf32>
    %11 = arith.addf %9, %10 : vector<13x13x128xf32>
    %12 = vector.extract_strided_slice %7 {offsets = [2, 2, 0], sizes = [13, 13, 128], strides = [1, 1, 1]} : vector<15x15x128xf32> to vector<13x13x128xf32>
    %13 = arith.addf %11, %12 : vector<13x13x128xf32>
    %cst_4 = arith.constant -2.000000e+00 : f32
    %14 = vector.broadcast %cst_4 : f32 to vector<15x15x128xf32>
    %15 = vector.extract_strided_slice %1 {offsets = [0, 1, 0], sizes = [15, 15, 128], strides = [1, 1, 1]} : vector<16x16x128xf32> to vector<15x15x128xf32>
    %16 = arith.subf %14, %15 : vector<15x15x128xf32>
    %17 = vector.extract_strided_slice %1 {offsets = [1, 0, 0], sizes = [15, 15, 128], strides = [1, 1, 1]} : vector<16x16x128xf32> to vector<15x15x128xf32>
    %18 = arith.subf %16, %17 : vector<15x15x128xf32>
    %19 = vector.extract_strided_slice %18 {offsets = [0, 0, 0], sizes = [13, 13, 128], strides = [1, 1, 1]} : vector<15x15x128xf32> to vector<13x13x128xf32>
    %20 = arith.addf %13, %19 : vector<13x13x128xf32>
    %21 = vector.extract_strided_slice %18 {offsets = [1, 1, 0], sizes = [13, 13, 128], strides = [1, 1, 1]} : vector<15x15x128xf32> to vector<13x13x128xf32>
    %22 = arith.addf %20, %21 : vector<13x13x128xf32>
    %23 = vector.extract_strided_slice %18 {offsets = [2, 2, 0], sizes = [13, 13, 128], strides = [1, 1, 1]} : vector<15x15x128xf32> to vector<13x13x128xf32>
    %24 = arith.addf %22, %23 : vector<13x13x128xf32>
    %c0_5 = arith.constant 0 : index
    %c0_6 = arith.constant 0 : index
    %c0_7 = arith.constant 0 : index
    %c0_8 = arith.constant 0 : index
    %25 = vector.load %arg2[%c0_5, %c0_6, %c0_7, %c0_8] : memref<1x13x13x128xf32, #tpu.memory_space<vmem>>, vector<1x13x13x128xf32>
    %26 = vector.shape_cast %25 : vector<1x13x13x128xf32> to vector<13x13x128xf32>
    %27 = vector.shape_cast %24 : vector<13x13x128xf32> to vector<1x13x13x128xf32>
    tpu.vector_store %arg2[%c0_5, %c0_6, %c0_7, %c0_8], %27 {strides = array<i32>} : memref<1x13x13x128xf32, #tpu.memory_space<vmem>>, vector<1x13x13x128xf32>,
    return
  }
  func.func @transform_0(%arg0: i32) -> (i32, i32, i32, i32) {
    %c0_i32 = arith.constant 0 : i32
    %c0_i32_0 = arith.constant 0 : i32
    %c0_i32_1 = arith.constant 0 : i32
    %c0_i32_2 = arith.constant 0 : i32
    return %c0_i32, %c0_i32_0, %c0_i32_1, %arg0 : i32, i32, i32, i32
  }
  func.func @transform_1(%arg0: i32) -> (i32, i32, i32, i32) {
    %c0_i32 = arith.constant 0 : i32
    %c0_i32_0 = arith.constant 0 : i32
    %c0_i32_1 = arith.constant 0 : i32
    %c0_i32_2 = arith.constant 0 : i32
    return %c0_i32, %c0_i32_0, %c0_i32_1, %arg0 : i32, i32, i32, i32
  }
}

</mosaic_0001>

<llo_original>
// kernel: _two_conv_forward_impl.1
$region0: #{_two_conv_forward_impl.1}
  #allocation0 [shape = 'u32[]', space=smem, size = 0x4, offset = 0x4, fixed_abs, tag = 'smem constant byte address 0x4 - core index']
  #allocation1 [shape = 'u32[72,128]{1,0:T(1,128)}', space=vmem, size = 0x9000, scoped, tag = 'internal scratch']
  %s0 = inlined_call_operand.vmem [shape: f32[1,16,16,128], index: 0, kind: input, shape index: {}]
  %s1 = inlined_call_operand.vmem [shape: f32[1,13,13,128], index: 1, kind: output, shape index: {}]
  %s2 = sld [smem:[#allocation0]]
  $region14: #{_two_conv_forward_impl.1} parent=0
    _
  %s4 = ssub.s32 1, %s2
  %s5 = scalar_select 0, %s4, %s2
  // Predicated region
  $region2: #{_two_conv_forward_impl.1} parent=0 // pred_check
    _
  $region3: #{_two_conv_forward_impl.1} parent=0 // pred_check_branch
    %7 = sbr.rel (0) target = $region5
  $region4: #{_two_conv_forward_impl.1} parent=0 // pred_region
    _
  $region5: #{_two_conv_forward_impl.1} parent=0 // pred_fallthru
    _
  %v8 = vld [vmem:[%s0] sm:$0xff]
  %v9 = vld [vmem:[%s0 + $0x8] sm:$0xff]
  %v10 = vld [vmem:[%s0 + $0x10] sm:$0xff]
  %v11 = vld [vmem:[%s0 + $0x18] sm:$0xff]
  %v12 = vld [vmem:[%s0 + $0x20] sm:$0xff]
  %v13 = vld [vmem:[%s0 + $0x28] sm:$0xff]
  %v14 = vld [vmem:[%s0 + $0x30] sm:$0xff]
  %v15 = vld [vmem:[%s0 + $0x38] sm:$0xff]
  %v16 = vld [vmem:[%s0 + $0x40] sm:$0xff]
  %v17 = vld [vmem:[%s0 + $0x48] sm:$0xff]
  %v18 = vld [vmem:[%s0 + $0x50] sm:$0xff]
  %v19 = vld [vmem:[%s0 + $0x58] sm:$0xff]
  %v20 = vld [vmem:[%s0 + $0x60] sm:$0xff]
  %v21 = vld [vmem:[%s0 + $0x68] sm:$0xff]
  %v22 = vld [vmem:[%s0 + $0x70] sm:$0xff]
  %v23 = vld [vmem:[%s0 + $0x78] sm:$0xff]
  %v24 = vld [vmem:[%s0 + $0x80] sm:$0xff]
  %v25 = vld [vmem:[%s0 + $0x88] sm:$0xff]
  %v26 = vld [vmem:[%s0 + $0x90] sm:$0xff]
  %v27 = vld [vmem:[%s0 + $0x98] sm:$0xff]
  %v28 = vld [vmem:[%s0 + $0xa0] sm:$0xff]
  %v29 = vld [vmem:[%s0 + $0xa8] sm:$0xff]
  %v30 = vld [vmem:[%s0 + $0xb0] sm:$0xff]
  %v31 = vld [vmem:[%s0 + $0xb8] sm:$0xff]
  %v32 = vld [vmem:[%s0 + $0xc0] sm:$0xff]
  %v33 = vld [vmem:[%s0 + $0xc8] sm:$0xff]
  %v34 = vld [vmem:[%s0 + $0xd0] sm:$0xff]
  %v35 = vld [vmem:[%s0 + $0xd8] sm:$0xff]
  %v36 = vld [vmem:[%s0 + $0xe0] sm:$0xff]
  %v37 = vld [vmem:[%s0 + $0xe8] sm:$0xff]
  %v38 = vld [vmem:[%s0 + $0xf0] sm:$0xff]
  %v39 = vld [vmem:[%s0 + $0xf8] sm:$0xff]
  %v40 = vsub.f32 -2.0, %v8
  %v41 = vsub.f32 -2.0, %v9
  %v42 = vsub.f32 -2.0, %v10
  %v43 = vsub.f32 -2.0, %v11
  %v44 = vsub.f32 -2.0, %v12
  %v45 = vsub.f32 -2.0, %v13
  %v46 = vsub.f32 -2.0, %v14
  %v47 = vsub.f32 -2.0, %v15
  %v48 = vsub.f32 -2.0, %v16
  %v49 = vsub.f32 -2.0, %v17
  %v50 = vsub.f32 -2.0, %v18
  %v51 = vsub.f32 -2.0, %v19
  %v52 = vsub.f32 -2.0, %v20
  %v53 = vsub.f32 -2.0, %v21
  %v54 = vsub.f32 -2.0, %v22
  %v55 = vsub.f32 -2.0, %v23
  %v56 = vsub.f32 -2.0, %v24
  %v57 = vsub.f32 -2.0, %v25
  %v58 = vsub.f32 -2.0, %v26
  %v59 = vsub.f32 -2.0, %v27
  %v60 = vsub.f32 -2.0, %v28
  %v61 = vsub.f32 -2.0, %v29
  %v62 = vsub.f32 -2.0, %v30
  %v63 = vsub.f32 -2.0, %v31
  %v64 = vsub.f32 -2.0, %v32
  %v65 = vsub.f32 -2.0, %v33
  %v66 = vsub.f32 -2.0, %v34
  %v67 = vsub.f32 -2.0, %v35
  %v68 = vsub.f32 -2.0, %v36
  %v69 = vsub.f32 -2.0, %v37
  %vm100 = vcmask 1040384
  %v101 = vrot.slane %v10, 7
  %v102 = vrot.slane %v11, 7
  %v103 = vsel %vm100, %v101, %v102
  %v104 = vrot.slane %v12, 7
  %v105 = vrot.slane %v13, 7
  %v106 = vsel %vm100, %v104, %v105
  %v107 = vrot.slane %v14, 7
  %v108 = vrot.slane %v15, 7
  %v109 = vsel %vm100, %v107, %v108
  %v110 = vrot.slane %v16, 7
  %v111 = vrot.slane %v17, 7
  %v112 = vsel %vm100, %v110, %v111
  %v113 = vrot.slane %v18, 7
  %v114 = vrot.slane %v19, 7
  %v115 = vsel %vm100, %v113, %v114
  %v116 = vrot.slane %v20, 7
  %v117 = vrot.slane %v21, 7
  %v118 = vsel %vm100, %v116, %v117
  %v119 = vrot.slane %v22, 7
  %v120 = vrot.slane %v23, 7
  %v121 = vsel %vm100, %v119, %v120
  %v122 = vrot.slane %v24, 7
  %v123 = vrot.slane %v25, 7
  %v124 = vsel %vm100, %v122, %v123
  %v125 = vrot.slane %v26, 7
  %v126 = vrot.slane %v27, 7
  %v127 = vsel %vm100, %v125, %v126
  %v128 = vrot.slane %v28, 7
  %v129 = vrot.slane %v29, 7
  %v130 = vsel %vm100, %v128, %v129
  %v131 = vrot.slane %v30, 7
  %v132 = vrot.slane %v31, 7
  %v133 = vsel %vm100, %v131, %v132
  %v134 = vrot.slane %v32, 7
  %v135 = vrot.slane %v33, 7
  %v136 = vsel %vm100, %v134, %v135
  %v137 = vrot.slane %v34, 7
  %v138 = vrot.slane %v35, 7
  %v139 = vsel %vm100, %v137, %v138
  %v140 = vrot.slane %v36, 7
  %v141 = vrot.slane %v37, 7
  %v142 = vsel %vm100, %v140, %v141
  %v143 = vrot.slane %v38, 7
  %v144 = vrot.slane %v39, 7
  %v145 = vsel %vm100, %v143, %v144
  %v176 = vsub.f32 %v40, %v101
  %v177 = vsub.f32 %v41, %v103
  %v178 = vsub.f32 %v42, %v104
  %v179 = vsub.f32 %v43, %v106
  %v180 = vsub.f32 %v44, %v107
  %v181 = vsub.f32 %v45, %v109
  %v182 = vsub.f32 %v46, %v110
  %v183 = vsub.f32 %v47, %v112
  %v184 = vsub.f32 %v48, %v113
  %v185 = vsub.f32 %v49, %v115
  %v186 = vsub.f32 %v50, %v116
  %v187 = vsub.f32 %v51, %v118
  %v188 = vsub.f32 %v52, %v119
  %v189 = vsub.f32 %v53, %v121
  %v190 = vsub.f32 %v54, %v122
  %v191 = vsub.f32 %v55, %v124
  %v192 = vsub.f32 %v56, %v125
  %v193 = vsub.f32 %v57, %v127
  %v194 = vsub.f32 %v58, %v128
  %v195 = vsub.f32 %v59, %v130
  %v196 = vsub.f32 %v60, %v131
  %v197 = vsub.f32 %v61, %v133
  %v198 = vsub.f32 %v62, %v134
  %v199 = vsub.f32 %v63, %v136
  %v200 = vsub.f32 %v64, %v137
  %v201 = vsub.f32 %v65, %v139
  %v202 = vsub.f32 %v66, %v140
  %v203 = vsub.f32 %v67, %v142
  %v204 = vsub.f32 %v68, %v143
  %v205 = vsub.f32 %v69, %v145
  %v206 = vadd.f32 %v176, 0.0
  %v207 = vadd.f32 %v177, 0.0
  %v208 = vadd.f32 %v178, 0.0
  %v209 = vadd.f32 %v179, 0.0
  %v210 = vadd.f32 %v180, 0.0
  %v211 = vadd.f32 %v181, 0.0
  %v212 = vadd.f32 %v182, 0.0
  %v213 = vadd.f32 %v183, 0.0
  %v214 = vadd.f32 %v184, 0.0
  %v215 = vadd.f32 %v185, 0.0
  %v216 = vadd.f32 %v186, 0.0
  %v217 = vadd.f32 %v187, 0.0
  %v218 = vadd.f32 %v188, 0.0
  %v219 = vadd.f32 %v189, 0.0
  %v220 = vadd.f32 %v190, 0.0
  %v221 = vadd.f32 %v191, 0.0
  %v222 = vadd.f32 %v192, 0.0
  %v223 = vadd.f32 %v193, 0.0
  %v224 = vadd.f32 %v194, 0.0
  %v225 = vadd.f32 %v195, 0.0
  %v226 = vadd.f32 %v196, 0.0
  %v227 = vadd.f32 %v197, 0.0
  %v228 = vadd.f32 %v198, 0.0
  %v229 = vadd.f32 %v199, 0.0
  %v230 = vadd.f32 %v200, 0.0
  %v231 = vadd.f32 %v201, 0.0
  %vm258 = vcmask 1046528
  %v259 = vrot.slane %v178, 1
  %v260 = vrot.slane %v179, 1
  %v261 = vsel %vm258, %v259, %v260
  %v262 = vrot.slane %v180, 1
  %v263 = vrot.slane %v181, 1
  %v264 = vsel %vm258, %v262, %v263
  %v265 = vrot.slane %v182, 1
  %v266 = vrot.slane %v183, 1
  %v267 = vsel %vm258, %v265, %v266
  %v268 = vrot.slane %v184, 1
  %v269 = vrot.slane %v185, 1
  %v270 = vsel %vm258, %v268, %v269
  %v271 = vrot.slane %v186, 1
  %v272 = vrot.slane %v187, 1
  %v273 = vsel %vm258, %v271, %v272
  %v274 = vrot.slane %v188, 1
  %v275 = vrot.slane %v189, 1
  %v276 = vsel %vm258, %v274, %v275
  %v277 = vrot.slane %v190, 1
  %v278 = vrot.slane %v191, 1
  %v279 = vsel %vm258, %v277, %v278
  %v280 = vrot.slane %v192, 1
  %v281 = vrot.slane %v193, 1
  %v282 = vsel %vm258, %v280, %v281
  %v283 = vrot.slane %v194, 1
  %v284 = vrot.slane %v195, 1
  %v285 = vsel %vm258, %v283, %v284
  %v286 = vrot.slane %v196, 1
  %v287 = vrot.slane %v197, 1
  %v288 = vsel %vm258, %v286, %v287
  %v289 = vrot.slane %v198, 1
  %v290 = vrot.slane %v199, 1
  %v291 = vsel %vm258, %v289, %v290
  %v292 = vrot.slane %v200, 1
  %v293 = vrot.slane %v201, 1
  %v294 = vsel %vm258, %v292, %v293
  %v295 = vrot.slane %v202, 1
  %v296 = vrot.slane %v203, 1
  %v297 = vsel %vm258, %v295, %v296
  %v324 = vadd.f32 %v206, %v261
  %v325 = vadd.f32 %v207, %v260
  %v326 = vadd.f32 %v208, %v264
  %v327 = vadd.f32 %v209, %v263
  %v328 = vadd.f32 %v210, %v267
  %v329 = vadd.f32 %v211, %v266
  %v330 = vadd.f32 %v212, %v270
  %v331 = vadd.f32 %v213, %v269
  %v332 = vadd.f32 %v214, %v273
  %v333 = vadd.f32 %v215, %v272
  %v334 = vadd.f32 %v216, %v276
  %v335 = vadd.f32 %v217, %v275
  %v336 = vadd.f32 %v218, %v279
  %v337 = vadd.f32 %v219, %v278
  %v338 = vadd.f32 %v220, %v282
  %v339 = vadd.f32 %v221, %v281
  %v340 = vadd.f32 %v222, %v285
  %v341 = vadd.f32 %v223, %v284
  %v342 = vadd.f32 %v224, %v288
  %v343 = vadd.f32 %v225, %v287
  %v344 = vadd.f32 %v226, %v291
  %v345 = vadd.f32 %v227, %v290
  %v346 = vadd.f32 %v228, %v294
  %v347 = vadd.f32 %v229, %v293
  %v348 = vadd.f32 %v230, %v297
  %v349 = vadd.f32 %v231, %v296
  %vm352 = vcmask 1045504
  %v353 = vrot.slane %v180, 2
  %v354 = vrot.slane %v181, 2
  %v355 = vsel %vm352, %v353, %v354
  %v356 = vrot.slane %v182, 2
  %v357 = vrot.slane %v183, 2
  %v358 = vsel %vm352, %v356, %v357
  %v359 = vrot.slane %v184, 2
  %v360 = vrot.slane %v185, 2
  %v361 = vsel %vm352, %v359, %v360
  %v362 = vrot.slane %v186, 2
  %v363 = vrot.slane %v187, 2
  %v364 = vsel %vm352, %v362, %v363
  %v365 = vrot.slane %v188, 2
  %v366 = vrot.slane %v189, 2
  %v367 = vsel %vm352, %v365, %v366
  %v368 = vrot.slane %v190, 2
  %v369 = vrot.slane %v191, 2
  %v370 = vsel %vm352, %v368, %v369
  %v371 = vrot.slane %v192, 2
  %v372 = vrot.slane %v193, 2
  %v373 = vsel %vm352, %v371, %v372
  %v374 = vrot.slane %v194, 2
  %v375 = vrot.slane %v195, 2
  %v376 = vsel %vm352, %v374, %v375
  %v377 = vrot.slane %v196, 2
  %v378 = vrot.slane %v197, 2
  %v379 = vsel %vm352, %v377, %v378
  %v380 = vrot.slane %v198, 2
  %v381 = vrot.slane %v199, 2
  %v382 = vsel %vm352, %v380, %v381
  %v383 = vrot.slane %v200, 2
  %v384 = vrot.slane %v201, 2
  %v385 = vsel %vm352, %v383, %v384
  %v386 = vrot.slane %v202, 2
  %v387 = vrot.slane %v203, 2
  %v388 = vsel %vm352, %v386, %v387
  %v389 = vrot.slane %v204, 2
  %v390 = vrot.slane %v205, 2
  %v391 = vsel %vm352, %v389, %v390
  %v418 = vadd.f32 %v324, %v355
  %v419 = vadd.f32 %v325, %v354
  %v420 = vadd.f32 %v326, %v358
  %v421 = vadd.f32 %v327, %v357
  %v422 = vadd.f32 %v328, %v361
  %v423 = vadd.f32 %v329, %v360
  %v424 = vadd.f32 %v330, %v364
  %v425 = vadd.f32 %v331, %v363
  %v426 = vadd.f32 %v332, %v367
  %v427 = vadd.f32 %v333, %v366
  %v428 = vadd.f32 %v334, %v370
  %v429 = vadd.f32 %v335, %v369
  %v430 = vadd.f32 %v336, %v373
  %v431 = vadd.f32 %v337, %v372
  %v432 = vadd.f32 %v338, %v376
  %v433 = vadd.f32 %v339, %v375
  %v434 = vadd.f32 %v340, %v379
  %v435 = vadd.f32 %v341, %v378
  %v436 = vadd.f32 %v342, %v382
  %v437 = vadd.f32 %v343, %v381
  %v438 = vadd.f32 %v344, %v385
  %v439 = vadd.f32 %v345, %v384
  %v440 = vadd.f32 %v346, %v388
  %v441 = vadd.f32 %v347, %v387
  %v442 = vadd.f32 %v348, %v391
  %v443 = vadd.f32 %v349, %v390
  %v444 = vadd.f32 %v418, %v176
  %v445 = vadd.f32 %v419, %v177
  %v446 = vadd.f32 %v420, %v178
  %v447 = vadd.f32 %v421, %v179
  %v448 = vadd.f32 %v422, %v180
  %v449 = vadd.f32 %v423, %v181
  %v450 = vadd.f32 %v424, %v182
  %v451 = vadd.f32 %v425, %v183
  %v452 = vadd.f32 %v426, %v184
  %v453 = vadd.f32 %v427, %v185
  %v454 = vadd.f32 %v428, %v186
  %v455 = vadd.f32 %v429, %v187
  %v456 = vadd.f32 %v430, %v188
  %v457 = vadd.f32 %v431, %v189
  %v458 = vadd.f32 %v432, %v190
  %v459 = vadd.f32 %v433, %v191
  %v460 = vadd.f32 %v434, %v192
  %v461 = vadd.f32 %v435, %v193
  %v462 = vadd.f32 %v436, %v194
  %v463 = vadd.f32 %v437, %v195
  %v464 = vadd.f32 %v438, %v196
  %v465 = vadd.f32 %v439, %v197
  %v466 = vadd.f32 %v440, %v198
  %v467 = vadd.f32 %v441, %v199
  %v468 = vadd.f32 %v442, %v200
  %v469 = vadd.f32 %v443, %v201
  %v470 = vadd.f32 %v444, %v261
  %v471 = vadd.f32 %v445, %v260
  %v472 = vadd.f32 %v446, %v264
  %v473 = vadd.f32 %v447, %v263
  %v474 = vadd.f32 %v448, %v267
  %v475 = vadd.f32 %v449, %v266
  %v476 = vadd.f32 %v450, %v270
  %v477 = vadd.f32 %v451, %v269
  %v478 = vadd.f32 %v452, %v273
  %v479 = vadd.f32 %v453, %v272
  %v480 = vadd.f32 %v454, %v276
  %v481 = vadd.f32 %v455, %v275
  %v482 = vadd.f32 %v456, %v279
  %v483 = vadd.f32 %v457, %v278
  %v484 = vadd.f32 %v458, %v282
  %v485 = vadd.f32 %v459, %v281
  %v486 = vadd.f32 %v460, %v285
  %v487 = vadd.f32 %v461, %v284
  %v488 = vadd.f32 %v462, %v288
  %v489 = vadd.f32 %v463, %v287
  %v490 = vadd.f32 %v464, %v291
  %v491 = vadd.f32 %v465, %v290
  %v492 = vadd.f32 %v466, %v294
  %v493 = vadd.f32 %v467, %v293
  %v494 = vadd.f32 %v468, %v297
  %v495 = vadd.f32 %v469, %v296
  %v496 = vadd.f32 %v470, %v355
  %v497 = vadd.f32 %v471, %v354
  %v498 = vadd.f32 %v472, %v358
  %v499 = vadd.f32 %v473, %v357
  %v500 = vadd.f32 %v474, %v361
  %v501 = vadd.f32 %v475, %v360
  %v502 = vadd.f32 %v476, %v364
  %v503 = vadd.f32 %v477, %v363
  %v504 = vadd.f32 %v478, %v367
  %v505 = vadd.f32 %v479, %v366
  %v506 = vadd.f32 %v480, %v370
  %v507 = vadd.f32 %v481, %v369
  %v508 = vadd.f32 %v482, %v373
  %v509 = vadd.f32 %v483, %v372
  %v510 = vadd.f32 %v484, %v376
  %v511 = vadd.f32 %v485, %v375
  %v512 = vadd.f32 %v486, %v379
  %v513 = vadd.f32 %v487, %v378
  %v514 = vadd.f32 %v488, %v382
  %v515 = vadd.f32 %v489, %v381
  %v516 = vadd.f32 %v490, %v385
  %v517 = vadd.f32 %v491, %v384
  %v518 = vadd.f32 %v492, %v388
  %v519 = vadd.f32 %v493, %v387
  %v520 = vadd.f32 %v494, %v391
  %v521 = vadd.f32 %v495, %v390
  %522 = vst [vmem:[%s1 - $0x1] sm:$0xfe] %v496
  %523 = vst [vmem:[%s1 + $0x7] sm:$0x3f] %v497
  %524 = vst [vmem:[%s1 + $0xf] sm:$0xfe] %v498
  %525 = vst [vmem:[%s1 + $0x17] sm:$0x3f] %v499
  %526 = vst [vmem:[%s1 + $0x1f] sm:$0xfe] %v500
  %527 = vst [vmem:[%s1 + $0x27] sm:$0x3f] %v501
  %528 = vst [vmem:[%s1 + $0x2f] sm:$0xfe] %v502
  %529 = vst [vmem:[%s1 + $0x37] sm:$0x3f] %v503
  %530 = vst [vmem:[%s1 + $0x3f] sm:$0xfe] %v504
  %531 = vst [vmem:[%s1 + $0x47] sm:$0x3f] %v505
  %532 = vst [vmem:[%s1 + $0x4f] sm:$0xfe] %v506
  %533 = vst [vmem:[%s1 + $0x57] sm:$0x3f] %v507
  %534 = vst [vmem:[%s1 + $0x5f] sm:$0xfe] %v508
  %535 = vst [vmem:[%s1 + $0x67] sm:$0x3f] %v509
  %536 = vst [vmem:[%s1 + $0x6f] sm:$0xfe] %v510
  %537 = vst [vmem:[%s1 + $0x77] sm:$0x3f] %v511
  %538 = vst [vmem:[%s1 + $0x7f] sm:$0xfe] %v512
  %539 = vst [vmem:[%s1 + $0x87] sm:$0x3f] %v513
  %540 = vst [vmem:[%s1 + $0x8f] sm:$0xfe] %v514
  %541 = vst [vmem:[%s1 + $0x97] sm:$0x3f] %v515
  %542 = vst [vmem:[%s1 + $0x9f] sm:$0xfe] %v516
  %543 = vst [vmem:[%s1 + $0xa7] sm:$0x3f] %v517
  %544 = vst [vmem:[%s1 + $0xaf] sm:$0xfe] %v518
  %545 = vst [vmem:[%s1 + $0xb7] sm:$0x3f] %v519
  %546 = vst [vmem:[%s1 + $0xbf] sm:$0xfe] %v520
  %547 = vst [vmem:[%s1 + $0xc7] sm:$0x3f] %v521
  // Predicated region
  $region6: #{_two_conv_forward_impl.1} parent=0 // pred_check
    _
  $region7: #{_two_conv_forward_impl.1} parent=0 // pred_check_branch
    %549 = sbr.rel (0) target = $region9
  $region8: #{_two_conv_forward_impl.1} parent=0 // pred_region
    _
  $region9: #{_two_conv_forward_impl.1} parent=0 // pred_fallthru
    _
  // Predicated region
  $region10: #{_two_conv_forward_impl.1} parent=0 // pred_check
    _
  $region11: #{_two_conv_forward_impl.1} parent=0 // pred_check_branch
    %551 = sbr.rel (0) target = $region13
  $region12: #{_two_conv_forward_impl.1} parent=0 // pred_region
    _
  $region13: #{_two_conv_forward_impl.1} parent=0 // pred_fallthru
    _

</llo_original>
